<compile_context>
chip_gen: v7x
topology: tpu7x:2x2x1
jax: 0.10.0
libtpu: 0.0.40
codegen_flags: <defaults>
</compile_context>

<pallas_src>
import jax
import jax.numpy as jnp
from jax import lax
from jax.experimental import pallas as pl
from jax.experimental.pallas import tpu as pltpu


_NEG = -1e30  # finite "-inf": exp() underflows to exactly 0.0, no NaNs downstream


def _round_up(v, m):
    return (v + m - 1) // m * m


def _make_distill_kernel(alpha, tau, batch, num_classes):
    alpha = float(alpha)
    tau = float(tau)

    def kernel(x_ref, w_ref, b_ref, out_ref, kd_ref, lab_ref, o_ref, acc_ref):
        k = pl.program_id(0)

        @pl.when(k == 0)
        def _init():
            acc_ref[...] = jnp.zeros_like(acc_ref)

        # Teacher matmul tile: bf16 operands on the MXU, f32 accumulation.
        acc_ref[...] += jnp.dot(x_ref[...], w_ref[...],
                                preferred_element_type=jnp.float32)

        @pl.when(k == pl.num_programs(0) - 1)
        def _epilogue():
            f32 = jnp.float32
            neg = f32(_NEG)
            Bp, Kp = acc_ref.shape

            col_ids = lax.broadcasted_iota(jnp.int32, (Bp, Kp), 1)
            col_valid = col_ids < num_classes                      # mask padded classes
            row_valid = (lax.broadcasted_iota(jnp.int32, (Bp, 1), 0) < batch
                         ).astype(f32)                             # mask padded rows

            teacher = jnp.where(col_valid, acc_ref[...] + b_ref[...], neg)
            out = jnp.where(col_valid, out_ref[...], neg)
            kd = jnp.where(col_valid, kd_ref[...], neg)

            def log_softmax(z):
                m = jnp.max(z, axis=-1, keepdims=True)
                e = jnp.exp(z - m)
                s = jnp.sum(e, axis=-1, keepdims=True)
                return z - m - jnp.log(s), e, s

            # ---- base criterion: CE(outputs, labels), mean over real batch ----
            m_o = jnp.max(out, axis=-1, keepdims=True)
            lse = m_o + jnp.log(jnp.sum(jnp.exp(out - m_o), axis=-1, keepdims=True))
            lab_mask = col_ids == lab_ref[...]                     # (Bp,Kp) vs (Bp,1)
            picked = jnp.sum(jnp.where(lab_mask, out, 0.0), axis=-1, keepdims=True)
            base_loss = jnp.sum((lse - picked) * row_valid) / f32(batch)

            # ---- soft distillation:
            #   F.kl_div(log_softmax(kd/T), log_softmax(t/T),
            #            reduction='sum', log_target=True) * T^2 / numel
            T = f32(tau)
            log_s, _, _ = log_softmax(kd / T)
            log_t, e_t, s_t = log_softmax(teacher / T)
            p_t = e_t / s_t                                        # reuse exp from log_softmax
            kl = jnp.sum(p_t * (log_t - log_s) * row_valid)        # padded cols: p_t == 0 exactly
            dist_loss = kl * (T * T) / f32(batch * num_classes)

            o_ref[0, 0] = base_loss * f32(1.0 - alpha) + dist_loss * f32(alpha)

    return kernel


def distillation_loss(inputs, outputs, outputs_kd, labels, teacher_w, teacher_b,
                      *, alpha=0.5, tau=2.0):
    """inputs: (B,C,H,W) NCHW; outputs/outputs_kd: (B,K); labels: (B,) int32."""
    B = inputs.shape[0]
    K = outputs.shape[1]
    x_flat = inputs.reshape(B, -1)          # row-major == torch flatten(1)
    D = x_flat.shape[1]

    Bp = _round_up(B, 8)                    # sublane granularity
    Kp = _round_up(K, 128)                  # lane granularity
    # D-tile: lane-aligned; with double buffering the resident working set is
    # 2*(Bp*tk + tk*Kp)*2B  — far under the v7x 64 MiB VMEM (32 MiB scoped).
    tk = min(512, _round_up(D, 128))
    Dp = _round_up(D, tk)
    nk = Dp // tk

    # Zero-pad (padded columns/rows are masked inside the kernel); bf16 for the
    # matmul operands only.
    x_p = jnp.pad(x_flat.astype(jnp.bfloat16), ((0, Bp - B), (0, Dp - D)))
    w_p = jnp.pad(teacher_w.astype(jnp.bfloat16), ((0, Dp - D), (0, Kp - K)))
    b_p = jnp.pad(teacher_b.astype(jnp.float32).reshape(1, K), ((0, 0), (0, Kp - K)))
    out_p = jnp.pad(outputs.astype(jnp.float32), ((0, Bp - B), (0, Kp - K)))
    kd_p = jnp.pad(outputs_kd.astype(jnp.float32), ((0, Bp - B), (0, Kp - K)))
    lab_p = jnp.pad(labels.astype(jnp.int32).reshape(B, 1), ((0, Bp - B), (0, 0)))

    kernel = _make_distill_kernel(alpha, tau, B, K)
    loss = pl.pallas_call(
        kernel,
        out_shape=jax.ShapeDtypeStruct((1, 1), jnp.float32),
        grid=(nk,),
        in_specs=[
            pl.BlockSpec((Bp, tk), lambda k: (0, k)),   # x tile   (streamed over D)
            pl.BlockSpec((tk, Kp), lambda k: (k, 0)),   # W tile   (streamed over D)
            pl.BlockSpec((1, Kp), lambda k: (0, 0)),    # teacher bias (resident)
            pl.BlockSpec((Bp, Kp), lambda k: (0, 0)),   # student class-token logits
            pl.BlockSpec((Bp, Kp), lambda k: (0, 0)),   # student dist-token logits
            pl.BlockSpec((Bp, 1), lambda k: (0, 0)),    # integer labels
        ],
        out_specs=pl.BlockSpec(memory_space=pltpu.MemorySpace.SMEM),  # scalar loss
        scratch_shapes=[pltpu.VMEM((Bp, Kp), jnp.float32)],           # teacher-logit acc
        compiler_params=pltpu.CompilerParams(
            dimension_semantics=("arbitrary",)),        # D is a reduction axis
    )(x_p, w_p, b_p, out_p, kd_p, lab_p)
    return loss[0, 0]


def _reference_loss(inputs, outputs, outputs_kd, labels, teacher_w, teacher_b,
                    *, alpha=0.5, tau=2.0):
    """Pure-JAX reference mirroring the PyTorch forward (soft distillation).

    The teacher matmul operands are rounded to bf16 (f32 accumulation) to match
    the kernel's MXU path — the standard TPU precision choice.
    """
    B, K = outputs.shape
    x32 = inputs.reshape(B, -1).astype(jnp.bfloat16).astype(jnp.float32)
    w32 = teacher_w.astype(jnp.bfloat16).astype(jnp.float32)
    teacher = x32 @ w32 + teacher_b.astype(jnp.float32)
    log_p = jax.nn.log_softmax(outputs.astype(jnp.float32), axis=1)
    base = jnp.mean(-jnp.take_along_axis(log_p, labels[:, None], axis=1)[:, 0])
    T = tau
    ls = jax.nn.log_softmax(outputs_kd.astype(jnp.float32) / T, axis=1)
    lt = jax.nn.log_softmax(teacher / T, axis=1)
    dist = jnp.sum(jnp.exp(lt) * (lt - ls)) * (T * T) / outputs_kd.size
    return base * (1 - alpha) + dist * alpha


if __name__ == "__main__":
    key = jax.random.PRNGKey(0)
    k_in, k_out, k_kd, k_lab, k_w, k_b = jax.random.split(key, 6)

    B, C, H, W = 2, 4, 16, 16
    K = 16                     # number of classes
    D = C * H * W

    inputs = jax.random.normal(k_in, (B, C, H, W), dtype=jnp.float32)
    outputs = jax.random.normal(k_out, (B, K), dtype=jnp.float32)        # class-token logits
    outputs_kd = jax.random.normal(k_kd, (B, K), dtype=jnp.float32)      # dist-token logits
    labels = jax.random.randint(k_lab, (B,), 0, K, dtype=jnp.int32)

    # Deterministic teacher (Linear D->K) init.
    teacher_w = jax.random.normal(k_w, (D, K), dtype=jnp.float32) * 0.02
    teacher_b = jax.random.normal(k_b, (K,), dtype=jnp.float32) * 0.02

    # jit so the wrapper pad/reshape/cast fuse into the same program as the kernel.
    loss_fn = jax.jit(distillation_loss, static_argnames=("alpha", "tau"))
    loss = loss_fn(inputs, outputs, outputs_kd, labels, teacher_w, teacher_b,
                   alpha=0.5, tau=2.0)
    loss = jax.block_until_ready(loss)

    ref = _reference_loss(inputs, outputs, outputs_kd, labels,
                          teacher_w, teacher_b, alpha=0.5, tau=2.0)
    assert jnp.allclose(loss, ref, rtol=1e-3, atol=1e-3), (loss, ref)

    print("KERNEL_OK")
</pallas_src>

<mosaic_0001>
module attributes {stable_mosaic.version = 11 : i64} {
  func.func @kernel(%arg0: i32, %arg1: memref<8x512xbf16, #tpu.memory_space<vmem>>, %arg2: memref<512x128xbf16, #tpu.memory_space<vmem>>, %arg3: memref<1x128xf32, #tpu.memory_space<vmem>>, %arg4: memref<8x128xf32, #tpu.memory_space<vmem>>, %arg5: memref<8x128xf32, #tpu.memory_space<vmem>>, %arg6: memref<8x1xi32, #tpu.memory_space<vmem>>, %arg7: memref<1x1xf32, #tpu.memory_space<smem>>, %arg8: memref<8x128xf32, #tpu.memory_space<vmem>>) attributes {dimension_semantics = [#tpu.dimension_semantics<arbitrary>], iteration_bounds = array<i64: 2>, scalar_prefetch = 0 : i64, scratch_operands = 1 : i64, tpu.core_type = #tpu.core_type<tc>, window_params = [{transform_indices = @transform_0, window_bounds = array<i64: 8, 512>}, {transform_indices = @transform_1, window_bounds = array<i64: 512, 128>}, {pipeline_mode = #tpu.pipeline_mode<synchronous>, transform_indices = @transform_2, window_bounds = array<i64: 1, 128>}, {pipeline_mode = #tpu.pipeline_mode<synchronous>, transform_indices = @transform_3, window_bounds = array<i64: 8, 128>}, {pipeline_mode = #tpu.pipeline_mode<synchronous>, transform_indices = @transform_4, window_bounds = array<i64: 8, 128>}, {pipeline_mode = #tpu.pipeline_mode<synchronous>, transform_indices = @transform_5, window_bounds = array<i64: 8, 1>}, {transform_indices = @transform_6, window_bounds = array<i64: 1, 1>}]} {
    %c0_i32 = arith.constant 0 : i32
    %0 = arith.cmpi eq, %arg0, %c0_i32 : i32
    %1 = arith.extui %0 : i1 to i32
    %c0_i32_0 = arith.constant 0 : i32
    %2 = arith.cmpi ne, %1, %c0_i32_0 : i32
    scf.if %2 {
      %cst_9 = arith.constant 0.000000e+00 : f32
      %12 = vector.broadcast %cst_9 : f32 to vector<8x128xf32>
      %c0_10 = arith.constant 0 : index
      %c0_11 = arith.constant 0 : index
      %13 = vector.load %arg8[%c0_10, %c0_11] : memref<8x128xf32, #tpu.memory_space<vmem>>, vector<8x128xf32>
      tpu.vector_store %arg8[%c0_10, %c0_11], %12 {strides = array<i32>} : memref<8x128xf32, #tpu.memory_space<vmem>>, vector<8x128xf32>,
    } else {
    }
    %c0 = arith.constant 0 : index
    %c0_1 = arith.constant 0 : index
    %3 = vector.load %arg8[%c0, %c0_1] : memref<8x128xf32, #tpu.memory_space<vmem>>, vector<8x128xf32>
    %c0_2 = arith.constant 0 : index
    %c0_3 = arith.constant 0 : index
    %4 = vector.load %arg1[%c0_2, %c0_3] : memref<8x512xbf16, #tpu.memory_space<vmem>>, vector<8x512xbf16>
    %c0_4 = arith.constant 0 : index
    %c0_5 = arith.constant 0 : index
    %5 = vector.load %arg2[%c0_4, %c0_5] : memref<512x128xbf16, #tpu.memory_space<vmem>>, vector<512x128xbf16>
    %cst = arith.constant dense<0.000000e+00> : vector<8x128xf32>
    %6 = tpu.matmul %4, %5, %cst {dimension_numbers = #tpu.dot_dimension_numbers<[1], [0], [0], [1], [0, 0, 1, 1], [], []>} : vector<8x512xbf16>, vector<512x128xbf16>, vector<8x128xf32> -> vector<8x128xf32>
    %7 = arith.addf %3, %6 : vector<8x128xf32>
    %c0_6 = arith.constant 0 : index
    %c0_7 = arith.constant 0 : index
    %8 = vector.load %arg8[%c0_6, %c0_7] : memref<8x128xf32, #tpu.memory_space<vmem>>, vector<8x128xf32>
    tpu.vector_store %arg8[%c0_6, %c0_7], %7 {strides = array<i32>} : memref<8x128xf32, #tpu.memory_space<vmem>>, vector<8x128xf32>,
    %c1_i32 = arith.constant 1 : i32
    %9 = arith.cmpi eq, %arg0, %c1_i32 : i32
    %10 = arith.extui %9 : i1 to i32
    %c0_i32_8 = arith.constant 0 : i32
    %11 = arith.cmpi ne, %10, %c0_i32_8 : i32
    scf.if %11 {
      %12 = tpu.iota {dimensions = array<i32: 1>} : vector<8x128xi32>
      %c16_i32 = arith.constant 16 : i32
      %13 = vector.broadcast %c16_i32 : i32 to vector<8x128xi32>
      %14 = arith.cmpi slt, %12, %13 : vector<8x128xi32>
      %15 = tpu.iota {dimensions = array<i32: 0>} : vector<8x1xi32>
      %c2_i32 = arith.constant 2 : i32
      %16 = vector.broadcast %c2_i32 : i32 to vector<8x1xi32>
      %17 = arith.cmpi slt, %15, %16 : vector<8x1xi32>
      %18 = arith.extui %17 : vector<8x1xi1> to vector<8x1xi32>
      %19 = arith.sitofp %18 : vector<8x1xi32> to vector<8x1xf32>
      %c0_9 = arith.constant 0 : index
      %c0_10 = arith.constant 0 : index
      %20 = vector.load %arg8[%c0_9, %c0_10] : memref<8x128xf32, #tpu.memory_space<vmem>>, vector<8x128xf32>
      %c0_11 = arith.constant 0 : index
      %c0_12 = arith.constant 0 : index
      %21 = vector.load %arg3[%c0_11, %c0_12] : memref<1x128xf32, #tpu.memory_space<vmem>>, vector<1x128xf32>
      %22 = vector.broadcast %21 : vector<1x128xf32> to vector<8x128xf32>
      %23 = arith.addf %20, %22 : vector<8x128xf32>
      %cst_13 = arith.constant -1.000000e+30 : f32
      %24 = vector.broadcast %cst_13 : f32 to vector<8x128xf32>
      %25 = arith.select %14, %23, %24 : vector<8x128xi1>, vector<8x128xf32>
      %c0_14 = arith.constant 0 : index
      %c0_15 = arith.constant 0 : index
      %26 = vector.load %arg4[%c0_14, %c0_15] : memref<8x128xf32, #tpu.memory_space<vmem>>, vector<8x128xf32>
      %cst_16 = arith.constant -1.000000e+30 : f32
      %27 = vector.broadcast %cst_16 : f32 to vector<8x128xf32>
      %28 = arith.select %14, %26, %27 : vector<8x128xi1>, vector<8x128xf32>
      %c0_17 = arith.constant 0 : index
      %c0_18 = arith.constant 0 : index
      %29 = vector.load %arg5[%c0_17, %c0_18] : memref<8x128xf32, #tpu.memory_space<vmem>>, vector<8x128xf32>
      %cst_19 = arith.constant -1.000000e+30 : f32
      %30 = vector.broadcast %cst_19 : f32 to vector<8x128xf32>
      %31 = arith.select %14, %29, %30 : vector<8x128xi1>, vector<8x128xf32>
      %cst_20 = arith.constant dense<0xFF800000> : vector<8xf32>
      %32 = vector.multi_reduction <maximumf>, %28, %cst_20 [1] : vector<8x128xf32> to vector<8xf32>
      %33 = vector.shape_cast %32 : vector<8xf32> to vector<8x1xf32>
      %34 = vector.broadcast %33 : vector<8x1xf32> to vector<8x128xf32>
      %35 = arith.subf %28, %34 : vector<8x128xf32>
      %36 = math.exp %35 : vector<8x128xf32>
      %cst_21 = arith.constant dense<0.000000e+00> : vector<8xf32>
      %37 = vector.multi_reduction <add>, %36, %cst_21 [1] : vector<8x128xf32> to vector<8xf32>
      %38 = vector.shape_cast %37 : vector<8xf32> to vector<8x1xf32>
      %39 = math.log %38 : vector<8x1xf32>
      %40 = arith.addf %33, %39 : vector<8x1xf32>
      %c0_22 = arith.constant 0 : index
      %c0_23 = arith.constant 0 : index
      %41 = vector.load %arg6[%c0_22, %c0_23] : memref<8x1xi32, #tpu.memory_space<vmem>>, vector<8x1xi32>
      %42 = vector.broadcast %41 : vector<8x1xi32> to vector<8x128xi32>
      %43 = arith.cmpi eq, %12, %42 : vector<8x128xi32>
      %cst_24 = arith.constant 0.000000e+00 : f32
      %44 = vector.broadcast %cst_24 : f32 to vector<8x128xf32>
      %45 = arith.select %43, %28, %44 : vector<8x128xi1>, vector<8x128xf32>
      %cst_25 = arith.constant dense<0.000000e+00> : vector<8xf32>
      %46 = vector.multi_reduction <add>, %45, %cst_25 [1] : vector<8x128xf32> to vector<8xf32>
      %47 = vector.shape_cast %46 : vector<8xf32> to vector<8x1xf32>
      %48 = arith.subf %40, %47 : vector<8x1xf32>
      %49 = arith.mulf %48, %19 : vector<8x1xf32>
      %50 = vector.shape_cast %49 : vector<8x1xf32> to vector<1x8x1xf32>
      %cst_26 = arith.constant dense<0.000000e+00> : vector<1xf32>
      %51 = vector.multi_reduction <add>, %50, %cst_26 [1, 2] : vector<1x8x1xf32> to vector<1xf32>
      %52 = vector.shape_cast %51 : vector<1xf32> to vector<1x1x1xf32>
      %53 = vector.extract %52[0, 0, 0] : f32 from vector<1x1x1xf32>
      %cst_27 = arith.constant 2.000000e+00 : f32
      %54 = arith.divf %53, %cst_27 : f32
      %cst_28 = arith.constant 2.000000e+00 : f32
      %55 = vector.broadcast %cst_28 : f32 to vector<8x128xf32>
      %56 = arith.divf %31, %55 : vector<8x128xf32>
      %cst_29 = arith.constant dense<0xFF800000> : vector<8xf32>
      %57 = vector.multi_reduction <maximumf>, %56, %cst_29 [1] : vector<8x128xf32> to vector<8xf32>
      %58 = vector.shape_cast %57 : vector<8xf32> to vector<8x1xf32>
      %59 = vector.broadcast %58 : vector<8x1xf32> to vector<8x128xf32>
      %60 = arith.subf %56, %59 : vector<8x128xf32>
      %61 = math.exp %60 : vector<8x128xf32>
      %cst_30 = arith.constant dense<0.000000e+00> : vector<8xf32>
      %62 = vector.multi_reduction <add>, %61, %cst_30 [1] : vector<8x128xf32> to vector<8xf32>
      %63 = vector.shape_cast %62 : vector<8xf32> to vector<8x1xf32>
      %64 = vector.broadcast %58 : vector<8x1xf32> to vector<8x128xf32>
      %65 = arith.subf %56, %64 : vector<8x128xf32>
      %66 = math.log %63 : vector<8x1xf32>
      %67 = vector.broadcast %66 : vector<8x1xf32> to vector<8x128xf32>
      %68 = arith.subf %65, %67 : vector<8x128xf32>
      %cst_31 = arith.constant 2.000000e+00 : f32
      %69 = vector.broadcast %cst_31 : f32 to vector<8x128xf32>
      %70 = arith.divf %25, %69 : vector<8x128xf32>
      %cst_32 = arith.constant dense<0xFF800000> : vector<8xf32>
      %71 = vector.multi_reduction <maximumf>, %70, %cst_32 [1] : vector<8x128xf32> to vector<8xf32>
      %72 = vector.shape_cast %71 : vector<8xf32> to vector<8x1xf32>
      %73 = vector.broadcast %72 : vector<8x1xf32> to vector<8x128xf32>
      %74 = arith.subf %70, %73 : vector<8x128xf32>
      %75 = math.exp %74 : vector<8x128xf32>
      %cst_33 = arith.constant dense<0.000000e+00> : vector<8xf32>
      %76 = vector.multi_reduction <add>, %75, %cst_33 [1] : vector<8x128xf32> to vector<8xf32>
      %77 = vector.shape_cast %76 : vector<8xf32> to vector<8x1xf32>
      %78 = vector.broadcast %72 : vector<8x1xf32> to vector<8x128xf32>
      %79 = arith.subf %70, %78 : vector<8x128xf32>
      %80 = math.log %77 : vector<8x1xf32>
      %81 = vector.broadcast %80 : vector<8x1xf32> to vector<8x128xf32>
      %82 = arith.subf %79, %81 : vector<8x128xf32>
      %83 = vector.broadcast %77 : vector<8x1xf32> to vector<8x128xf32>
      %84 = arith.divf %75, %83 : vector<8x128xf32>
      %85 = arith.subf %82, %68 : vector<8x128xf32>
      %86 = arith.mulf %84, %85 : vector<8x128xf32>
      %87 = vector.broadcast %19 : vector<8x1xf32> to vector<8x128xf32>
      %88 = arith.mulf %86, %87 : vector<8x128xf32>
      %89 = vector.shape_cast %88 : vector<8x128xf32> to vector<1x8x128xf32>
      %cst_34 = arith.constant dense<0.000000e+00> : vector<1xf32>
      %90 = vector.multi_reduction <add>, %89, %cst_34 [1, 2] : vector<1x8x128xf32> to vector<1xf32>
      %91 = vector.shape_cast %90 : vector<1xf32> to vector<1x1x1xf32>
      %92 = vector.extract %91[0, 0, 0] : f32 from vector<1x1x1xf32>
      %cst_35 = arith.constant 2.000000e+00 : f32
      %cst_36 = arith.constant 2.000000e+00 : f32
      %93 = arith.mulf %cst_35, %cst_36 : f32
      %94 = arith.mulf %92, %93 : f32
      %cst_37 = arith.constant 3.200000e+01 : f32
      %95 = arith.divf %94, %cst_37 : f32
      %cst_38 = arith.constant 5.000000e-01 : f32
      %96 = arith.mulf %54, %cst_38 : f32
      %cst_39 = arith.constant 5.000000e-01 : f32
      %97 = arith.mulf %95, %cst_39 : f32
      %98 = arith.addf %96, %97 : f32
      %c0_40 = arith.constant 0 : index
      %c0_41 = arith.constant 0 : index
      %99 = memref.load %arg7[%c0_40, %c0_41] : memref<1x1xf32, #tpu.memory_space<smem>>
      memref.store %98, %arg7[%c0_40, %c0_41] : memref<1x1xf32, #tpu.memory_space<smem>>
    } else {
    }
    return
  }
  func.func @transform_0(%arg0: i32) -> (i32, i32) {
    %c0_i32 = arith.constant 0 : i32
    %c0_i32_0 = arith.constant 0 : i32
    return %c0_i32, %arg0 : i32, i32
  }
  func.func @transform_1(%arg0: i32) -> (i32, i32) {
    %c0_i32 = arith.constant 0 : i32
    %c0_i32_0 = arith.constant 0 : i32
    return %arg0, %c0_i32 : i32, i32
  }
  func.func @transform_2(%arg0: i32) -> (i32, i32) {
    %c0_i32 = arith.constant 0 : i32
    %c0_i32_0 = arith.constant 0 : i32
    %c0_i32_1 = arith.constant 0 : i32
    return %c0_i32, %c0_i32_0 : i32, i32
  }
  func.func @transform_3(%arg0: i32) -> (i32, i32) {
    %c0_i32 = arith.constant 0 : i32
    %c0_i32_0 = arith.constant 0 : i32
    %c0_i32_1 = arith.constant 0 : i32
    return %c0_i32, %c0_i32_0 : i32, i32
  }
  func.func @transform_4(%arg0: i32) -> (i32, i32) {
    %c0_i32 = arith.constant 0 : i32
    %c0_i32_0 = arith.constant 0 : i32
    %c0_i32_1 = arith.constant 0 : i32
    return %c0_i32, %c0_i32_0 : i32, i32
  }
  func.func @transform_5(%arg0: i32) -> (i32, i32) {
    %c0_i32 = arith.constant 0 : i32
    %c0_i32_0 = arith.constant 0 : i32
    %c0_i32_1 = arith.constant 0 : i32
    return %c0_i32, %c0_i32_0 : i32, i32
  }
  func.func @transform_6(%arg0: i32) -> (i32, i32) {
    %c0_i32 = arith.constant 0 : i32
    %c0_i32_0 = arith.constant 0 : i32
    %c0_i32_1 = arith.constant 0 : i32
    return %c0_i32, %c0_i32_0 : i32, i32
  }
}

</mosaic_0001>

<llo_original>
// kernel: distillation_loss.1
$region0: #{distillation_loss.1}
  #allocation0 [shape = 'u32[]', space=smem, size = 0x4, offset = 0x4, fixed_abs, tag = 'smem constant byte address 0x4 - core index']
  #allocation1 [shape = 'u32[144,128]{1,0:T(1,128)}', space=vmem, size = 0x12000, scoped, tag = 'internal scratch']
  #allocation2 [shape = 'f32[8,128]{1,0:T(8,128)}', space=vmem, size = 0x1000, scoped, tag = 'scratch operand']
  %s0 = inlined_call_operand.vmem [shape: bf16[8,1024], index: 0, kind: input, shape index: {}]
  %s1 = inlined_call_operand.vmem [shape: bf16[1024,128], index: 1, kind: input, shape index: {}]
  %s2 = inlined_call_operand.vmem [shape: f32[1,128], index: 2, kind: input, shape index: {}]
  %s3 = inlined_call_operand.vmem [shape: f32[8,128], index: 3, kind: input, shape index: {}]
  %s4 = inlined_call_operand.vmem [shape: f32[8,128], index: 4, kind: input, shape index: {}]
  %s5 = inlined_call_operand.vmem [shape: s32[8,1], index: 5, kind: input, shape index: {}]
  %s6 = inlined_call_operand.hbm [shape: f32[1,1], index: 6, kind: output, shape index: {}]
  %s7 = sld [smem:[#allocation0]]
  $region65: #{distillation_loss.1} parent=0
    _
  %s9 = ssub.s32 1, %s7
  %s10 = scalar_select 0, %s9, %s7
  $region1: #{distillation_loss.1} parent=0
    #allocation3 [shape = 'u8[512]{0}', space=smem, size = 0x200, scoped, tag = 'output window, operand 0, single buffered']
    #allocation4 [shape = 's32[2]{0}', space=sflag, size = 0x8, scoped, tag = 'scoped memory for distillation_loss.1']
    %11 = vsyncpa [#allocation4], 0
    loop: start=0, step=1, limit=4
    $region2: #{distillation_loss.1} parent=1 // loop_pre_header
      _
    $region3: #{distillation_loss.1} parent=1 // loop_header
      %s13 = sphi 0, %s17
      %p14 = scmp.ge.s32.totalorder %s13, 4
      %s23 = sphi 0, %s25
      %s26 = sphi 0, %s23
      %s27 = sphi 0, %s26
      %s43 = sphi 0, %s27
      %s49 = sphi 0, %s51
      %s52 = sphi 0, %s49
      %s53 = sphi 0, %s52
      %s69 = sphi 0, %s53
      %s73 = sphi 0, %s73
      %s75 = sphi 0, %s73
      %s76 = sphi 0, %s75
      %s90 = sphi 0, %s76
      %s94 = sphi 0, %s94
      %s96 = sphi 0, %s94
      %s97 = sphi 0, %s96
      %s111 = sphi 0, %s97
      %s115 = sphi 0, %s115
      %s117 = sphi 0, %s115
      %s118 = sphi 0, %s117
      %s132 = sphi 0, %s118
      %s136 = sphi 0, %s136
      %s138 = sphi 0, %s136
      %s139 = sphi 0, %s138
      %s153 = sphi 0, %s139
      %s157 = sphi 0, %s157
      %s159 = sphi 0, %s157
      %s160 = sphi 0, %s159
      %s174 = sphi 0, %s160
    $region4: #{distillation_loss.1} parent=1 // loop_header_branch
      %16 = sbr.rel (%p14) target = $region8
    $region5: #{distillation_loss.1} parent=1 // loop_body
      %s18 = ssub.s32 %s13, 1
      %s19 = ssub.s32 %s13, 2
      %s20 = sadd.s32 %s13, 1
      %s21 = ssub.s32 %s13, %s20
      %p22 = scmp.eq.s32.totalorder %s21, 0
      %s24 = sadd.s32 %s23, 1
      %s25 = scalar_select %p22, %s23, %s24
      %p28 = pneg %p22
      %p29 = scmp.eq.s32.totalorder %s13, 1
      %p30 = por %p28, %p29
      %p31 = scmp.ne.s32.totalorder %s23, %s26
      %p32 = scmp.eq.s32.totalorder %s13, 0
      %p33 = por %p31, %p32
      %p34 = scmp.ne.s32.totalorder %s23, %s26
      %p35 = scmp.eq.s32.totalorder %s18, 1
      %p36 = por %p34, %p35
      %p37 = scmp.ne.s32.totalorder %s26, %s27
      %p38 = scmp.eq.s32.totalorder %s18, 0
      %p39 = por %p37, %p38
      %p40 = scmp.ne.s32.totalorder %s26, %s27
      %p41 = scmp.eq.s32.totalorder %s19, 1
      %p42 = por %p40, %p41
      %p44 = scmp.ne.s32.totalorder %s27, %s43
      %p45 = scmp.eq.s32.totalorder %s19, 0
      %p46 = por %p44, %p45
      %s47 = ssub.s32 %s13, %s20
      %p48 = scmp.eq.s32.totalorder %s47, 0
      %s50 = sadd.s32 %s49, 1
      %s51 = scalar_select %p48, %s49, %s50
      %p54 = pneg %p48
      %p55 = scmp.eq.s32.totalorder %s13, 1
      %p56 = por %p54, %p55
      %p57 = scmp.ne.s32.totalorder %s49, %s52
      %p58 = scmp.eq.s32.totalorder %s13, 0
      %p59 = por %p57, %p58
      %p60 = scmp.ne.s32.totalorder %s49, %s52
      %p61 = scmp.eq.s32.totalorder %s18, 1
      %p62 = por %p60, %p61
      %p63 = scmp.ne.s32.totalorder %s52, %s53
      %p64 = scmp.eq.s32.totalorder %s18, 0
      %p65 = por %p63, %p64
      %p66 = scmp.ne.s32.totalorder %s52, %s53
      %p67 = scmp.eq.s32.totalorder %s19, 1
      %p68 = por %p66, %p67
      %p70 = scmp.ne.s32.totalorder %s53, %s69
      %p71 = scmp.eq.s32.totalorder %s19, 0
      %p72 = por %p70, %p71
      %s74 = sadd.s32 %s73, 1
      %p77 = scmp.eq.s32.totalorder %s13, 1
      %p78 = scmp.ne.s32.totalorder %s73, %s75
      %p79 = scmp.eq.s32.totalorder %s13, 0
      %p80 = por %p78, %p79
      %p81 = scmp.ne.s32.totalorder %s73, %s75
      %p82 = scmp.eq.s32.totalorder %s18, 1
      %p83 = por %p81, %p82
      %p84 = scmp.ne.s32.totalorder %s75, %s76
      %p85 = scmp.eq.s32.totalorder %s18, 0
      %p86 = por %p84, %p85
      %p87 = scmp.ne.s32.totalorder %s75, %s76
      %p88 = scmp.eq.s32.totalorder %s19, 1
      %p89 = por %p87, %p88
      %p91 = scmp.ne.s32.totalorder %s76, %s90
      %p92 = scmp.eq.s32.totalorder %s19, 0
      %p93 = por %p91, %p92
      %s95 = sadd.s32 %s94, 1
      %p98 = scmp.eq.s32.totalorder %s13, 1
      %p99 = scmp.ne.s32.totalorder %s94, %s96
      %p100 = scmp.eq.s32.totalorder %s13, 0
      %p101 = por %p99, %p100
      %p102 = scmp.ne.s32.totalorder %s94, %s96
      %p103 = scmp.eq.s32.totalorder %s18, 1
      %p104 = por %p102, %p103
      %p105 = scmp.ne.s32.totalorder %s96, %s97
      %p106 = scmp.eq.s32.totalorder %s18, 0
      %p107 = por %p105, %p106
      %p108 = scmp.ne.s32.totalorder %s96, %s97
      %p109 = scmp.eq.s32.totalorder %s19, 1
      %p110 = por %p108, %p109
      %p112 = scmp.ne.s32.totalorder %s97, %s111
      %p113 = scmp.eq.s32.totalorder %s19, 0
      %p114 = por %p112, %p113
      %s116 = sadd.s32 %s115, 1
      %p119 = scmp.eq.s32.totalorder %s13, 1
      %p120 = scmp.ne.s32.totalorder %s115, %s117
      %p121 = scmp.eq.s32.totalorder %s13, 0
      %p122 = por %p120, %p121
      %p123 = scmp.ne.s32.totalorder %s115, %s117
      %p124 = scmp.eq.s32.totalorder %s18, 1
      %p125 = por %p123, %p124
      %p126 = scmp.ne.s32.totalorder %s117, %s118
      %p127 = scmp.eq.s32.totalorder %s18, 0
      %p128 = por %p126, %p127
      %p129 = scmp.ne.s32.totalorder %s117, %s118
      %p130 = scmp.eq.s32.totalorder %s19, 1
      %p131 = por %p129, %p130
      %p133 = scmp.ne.s32.totalorder %s118, %s132
      %p134 = scmp.eq.s32.totalorder %s19, 0
      %p135 = por %p133, %p134
      %s137 = sadd.s32 %s136, 1
      %p140 = scmp.eq.s32.totalorder %s13, 1
      %p141 = scmp.ne.s32.totalorder %s136, %s138
      %p142 = scmp.eq.s32.totalorder %s13, 0
      %p143 = por %p141, %p142
      %p144 = scmp.ne.s32.totalorder %s136, %s138
      %p145 = scmp.eq.s32.totalorder %s18, 1
      %p146 = por %p144, %p145
      %p147 = scmp.ne.s32.totalorder %s138, %s139
      %p148 = scmp.eq.s32.totalorder %s18, 0
      %p149 = por %p147, %p148
      %p150 = scmp.ne.s32.totalorder %s138, %s139
      %p151 = scmp.eq.s32.totalorder %s19, 1
      %p152 = por %p150, %p151
      %p154 = scmp.ne.s32.totalorder %s139, %s153
      %p155 = scmp.eq.s32.totalorder %s19, 0
      %p156 = por %p154, %p155
      %s158 = sadd.s32 %s157, 1
      %p161 = scmp.eq.s32.totalorder %s13, 1
      %p162 = scmp.ne.s32.totalorder %s157, %s159
      %p163 = scmp.eq.s32.totalorder %s13, 0
      %p164 = por %p162, %p163
      %p165 = scmp.ne.s32.totalorder %s157, %s159
      %p166 = scmp.eq.s32.totalorder %s18, 1
      %p167 = por %p165, %p166
      %p168 = scmp.ne.s32.totalorder %s159, %s160
      %p169 = scmp.eq.s32.totalorder %s18, 0
      %p170 = por %p168, %p169
      %p171 = scmp.ne.s32.totalorder %s159, %s160
      %p172 = scmp.eq.s32.totalorder %s19, 1
      %p173 = por %p171, %p172
      %p175 = scmp.ne.s32.totalorder %s160, %s174
      %p176 = scmp.eq.s32.totalorder %s19, 0
      %p177 = por %p175, %p176
      %p178 = scmp.le.s32.totalorder 1, %s13
      %p179 = scmp.lt.s32.totalorder %s13, 3
      %p180 = pnand %p178, %p179
      %p181 = pneg %p180
      // Predicated region
      $region9: #{distillation_loss.1} parent=5 // pred_check
        _
      $region10: #{distillation_loss.1} parent=5 // pred_check_branch
        %183 = sbr.rel (%p180) target = $region12
      $region11: #{distillation_loss.1} parent=5 // pred_region
        %s184 = ssub.s32 %s13, 1
        // Predicated region
        $region13: #{distillation_loss.1} parent=11 // pred_check
          %p185 = pneg %p86
        $region14: #{distillation_loss.1} parent=11 // pred_check_branch
          %187 = sbr.rel (%p185) target = $region16
        $region15: #{distillation_loss.1} parent=11 // pred_region
          _
        $region16: #{distillation_loss.1} parent=11 // pred_fallthru
          _
        // Predicated region
        $region17: #{distillation_loss.1} parent=11 // pred_check
          %p188 = pneg %p107
        $region18: #{distillation_loss.1} parent=11 // pred_check_branch
          %190 = sbr.rel (%p188) target = $region20
        $region19: #{distillation_loss.1} parent=11 // pred_region
          _
        $region20: #{distillation_loss.1} parent=11 // pred_fallthru
          _
        // Predicated region
        $region21: #{distillation_loss.1} parent=11 // pred_check
          %p191 = pneg %p128
        $region22: #{distillation_loss.1} parent=11 // pred_check_branch
          %193 = sbr.rel (%p191) target = $region24
        $region23: #{distillation_loss.1} parent=11 // pred_region
          _
        $region24: #{distillation_loss.1} parent=11 // pred_fallthru
          _
        // Predicated region
        $region25: #{distillation_loss.1} parent=11 // pred_check
          %p194 = pneg %p149
        $region26: #{distillation_loss.1} parent=11 // pred_check_branch
          %196 = sbr.rel (%p194) target = $region28
        $region27: #{distillation_loss.1} parent=11 // pred_region
          _
        $region28: #{distillation_loss.1} parent=11 // pred_fallthru
          _
      $region12: #{distillation_loss.1} parent=5 // pred_fallthru
        _
      %p197 = scmp.lt.s32.totalorder %s13, 2
      // Predicated region
      $region29: #{distillation_loss.1} parent=5 // pred_check
        %p198 = pneg %p197
      $region30: #{distillation_loss.1} parent=5 // pred_check_branch
        %200 = sbr.rel (%p198) target = $region32
      $region31: #{distillation_loss.1} parent=5 // pred_region
        // Predicated region
        $region33: #{distillation_loss.1} parent=31 // pred_check
          %p201 = pneg %p33
        $region34: #{distillation_loss.1} parent=31 // pred_check_branch
          %203 = sbr.rel (%p201) target = $region36
        $region35: #{distillation_loss.1} parent=31 // pred_region
          %s204 = smul.u32 4, %s13
          %p205 = scmp.lt.s32.totalorder %s204, 7
          %s206 = scalar_select %p205, %s204, 7
          %s207 = smul.addr %s206, 4
          %s208 = scalar_lea.vmem %s0, %s207
          %s209 = smul.u32 4, %s13
        $region36: #{distillation_loss.1} parent=31 // pred_fallthru
          _
        // Predicated region
        $region37: #{distillation_loss.1} parent=31 // pred_check
          %p210 = pneg %p59
        $region38: #{distillation_loss.1} parent=31 // pred_check_branch
          %212 = sbr.rel (%p210) target = $region40
        $region39: #{distillation_loss.1} parent=31 // pred_region
          %s213 = smul.u32 64, %s13
          %p214 = scmp.lt.s32.totalorder %s213, 127
          %s215 = scalar_select %p214, %s213, 127
          %s216 = smul.addr %s215, 4
          %s217 = scalar_lea.vmem %s1, %s216
          %s218 = smul.u32 64, %s13
        $region40: #{distillation_loss.1} parent=31 // pred_fallthru
          _
      $region32: #{distillation_loss.1} parent=5 // pred_fallthru
        _
      %p219 = scmp.le.s32.totalorder 1, %s13
      %p220 = scmp.lt.s32.totalorder %s13, 3
      %p221 = pnand %p219, %p220
      %p222 = pneg %p221
      // Predicated region
      $region41: #{distillation_loss.1} parent=5 // pred_check
        _
      $region42: #{distillation_loss.1} parent=5 // pred_check_branch
        %224 = sbr.rel (%p221) target = $region44
      $region43: #{distillation_loss.1} parent=5 // pred_region
        %s225 = ssub.s32 %s13, 1
        %s226 = smul.u32 4, %s18
        %p227 = scmp.lt.s32.totalorder %s226, 7
        %s228 = scalar_select %p227, %s226, 7
        %s229 = smul.addr %s228, 4
        %s230 = scalar_lea.vmem %s0, %s229
        %p231 = pneg %p39
        %p232 = pneg %p36
        %s233 = smul.u32 64, %s18
        %p234 = scmp.lt.s32.totalorder %s233, 127
        %s235 = scalar_select %p234, %s233, 127
        %s236 = smul.addr %s235, 4
        %s237 = scalar_lea.vmem %s1, %s236
        %p238 = pneg %p65
        %p239 = pneg %p62
        %p240 = pneg %p86
        %p241 = pneg %p83
        %p242 = pneg %p107
        %p243 = pneg %p104
        %p244 = pneg %p128
        %p245 = pneg %p125
        %p246 = pneg %p149
        %p247 = pneg %p146
        %p248 = pneg %p170
        %p249 = pneg %p167
        %s250 = smul.u32 4, %s18
        %p251 = scmp.lt.s32.totalorder %s250, 7
        %s252 = scalar_select %p251, %s250, 7
        %s253 = smul.addr %s252, 4
        %s254 = scalar_lea.vmem %s0, %s253
        %s255 = smul.u32 4, %s18
        %s256 = smul.u32 64, %s18
        %p257 = scmp.lt.s32.totalorder %s256, 127
        %s258 = scalar_select %p257, %s256, 127
        %s259 = smul.addr %s258, 4
        %s260 = scalar_lea.vmem %s1, %s259
        %s261 = smul.u32 64, %s18
        %p263 = scmp.eq.s32.totalorder %s18, 0
        // Predicated region
        $region45: #{distillation_loss.1} parent=43 // pred_check
          %p264 = pneg %p263
        $region46: #{distillation_loss.1} parent=43 // pred_check_branch
          %266 = sbr.rel (%p264) target = $region48
        $region47: #{distillation_loss.1} parent=43 // pred_region
          %267 = vst [vmem:[#allocation2] sm:$0xff] 0.0
        $region48: #{distillation_loss.1} parent=43 // pred_fallthru
          _
        %v268 = vld [vmem:[#allocation2] sm:$0xff]
        %v269 = vld [vmem:[%s254] sm:$0xff]
        %v270 = vld [vmem:[%s254 + $0x8] sm:$0xff]
        %v271 = vld [vmem:[%s260] sm:$0xf]
        %v272 = vld [vmem:[%s260 + $0x4] sm:$0xf]
        %v273 = vld [vmem:[%s260 + $0x8] sm:$0xf]
        %v274 = vld [vmem:[%s260 + $0xc] sm:$0xf]
        %v275 = vld [vmem:[%s260 + $0x10] sm:$0xf]
        %v276 = vld [vmem:[%s260 + $0x14] sm:$0xf]
        %v277 = vld [vmem:[%s260 + $0x18] sm:$0xf]
        %v278 = vld [vmem:[%s260 + $0x1c] sm:$0xf]
        %v279 = vld [vmem:[%s260 + $0x20] sm:$0xf]
        %v280 = vld [vmem:[%s260 + $0x24] sm:$0xf]
        %v281 = vld [vmem:[%s260 + $0x28] sm:$0xf]
        %v282 = vld [vmem:[%s260 + $0x2c] sm:$0xf]
        %v283 = vld [vmem:[%s260 + $0x30] sm:$0xf]
        %v284 = vld [vmem:[%s260 + $0x34] sm:$0xf]
        %v285 = vld [vmem:[%s260 + $0x38] sm:$0xf]
        %v286 = vld [vmem:[%s260 + $0x3c] sm:$0xf]
        %v287 = vld [vmem:[%s260 + $0x40] sm:$0xf]
        %v288 = vld [vmem:[%s260 + $0x44] sm:$0xf]
        %v289 = vld [vmem:[%s260 + $0x48] sm:$0xf]
        %v290 = vld [vmem:[%s260 + $0x4c] sm:$0xf]
        %v291 = vld [vmem:[%s260 + $0x50] sm:$0xf]
        %v292 = vld [vmem:[%s260 + $0x54] sm:$0xf]
        %v293 = vld [vmem:[%s260 + $0x58] sm:$0xf]
        %v294 = vld [vmem:[%s260 + $0x5c] sm:$0xf]
        %v295 = vld [vmem:[%s260 + $0x60] sm:$0xf]
        %v296 = vld [vmem:[%s260 + $0x64] sm:$0xf]
        %v297 = vld [vmem:[%s260 + $0x68] sm:$0xf]
        %v298 = vld [vmem:[%s260 + $0x6c] sm:$0xf]
        %v299 = vld [vmem:[%s260 + $0x70] sm:$0xf]
        %v300 = vld [vmem:[%s260 + $0x74] sm:$0xf]
        %v301 = vld [vmem:[%s260 + $0x78] sm:$0xf]
        %v302 = vld [vmem:[%s260 + $0x7c] sm:$0xf]
        %v303 = vld [vmem:[%s260 + $0x80] sm:$0xf]
        %v304 = vld [vmem:[%s260 + $0x84] sm:$0xf]
        %v305 = vld [vmem:[%s260 + $0x88] sm:$0xf]
        %v306 = vld [vmem:[%s260 + $0x8c] sm:$0xf]
        %v307 = vld [vmem:[%s260 + $0x90] sm:$0xf]
        %v308 = vld [vmem:[%s260 + $0x94] sm:$0xf]
        %v309 = vld [vmem:[%s260 + $0x98] sm:$0xf]
        %v310 = vld [vmem:[%s260 + $0x9c] sm:$0xf]
        %v311 = vld [vmem:[%s260 + $0xa0] sm:$0xf]
        %v312 = vld [vmem:[%s260 + $0xa4] sm:$0xf]
        %v313 = vld [vmem:[%s260 + $0xa8] sm:$0xf]
        %v314 = vld [vmem:[%s260 + $0xac] sm:$0xf]
        %v315 = vld [vmem:[%s260 + $0xb0] sm:$0xf]
        %v316 = vld [vmem:[%s260 + $0xb4] sm:$0xf]
        %v317 = vld [vmem:[%s260 + $0xb8] sm:$0xf]
        %v318 = vld [vmem:[%s260 + $0xbc] sm:$0xf]
        %v319 = vld [vmem:[%s260 + $0xc0] sm:$0xf]
        %v320 = vld [vmem:[%s260 + $0xc4] sm:$0xf]
        %v321 = vld [vmem:[%s260 + $0xc8] sm:$0xf]
        %v322 = vld [vmem:[%s260 + $0xcc] sm:$0xf]
        %v323 = vld [vmem:[%s260 + $0xd0] sm:$0xf]
        %v324 = vld [vmem:[%s260 + $0xd4] sm:$0xf]
        %v325 = vld [vmem:[%s260 + $0xd8] sm:$0xf]
        %v326 = vld [vmem:[%s260 + $0xdc] sm:$0xf]
        %v327 = vld [vmem:[%s260 + $0xe0] sm:$0xf]
        %v328 = vld [vmem:[%s260 + $0xe4] sm:$0xf]
        %v329 = vld [vmem:[%s260 + $0xe8] sm:$0xf]
        %v330 = vld [vmem:[%s260 + $0xec] sm:$0xf]
        %v331 = vld [vmem:[%s260 + $0xf0] sm:$0xf]
        %v332 = vld [vmem:[%s260 + $0xf4] sm:$0xf]
        %v333 = vld [vmem:[%s260 + $0xf8] sm:$0xf]
        %v334 = vld [vmem:[%s260 + $0xfc] sm:$0xf]
        %v337 = vunpack.c.l.b16 %v269
        %v338 = vunpack.c.h.b16 %v269
        %v339 = vunpack.c.l.b16 %v270
        %v340 = vunpack.c.h.b16 %v270
        %v341 = vpack.c.b16 %v337, %v337
        %v342 = vpack.c.b16 %v338, %v338
        %v343 = vpack.c.b16 %v339, %v339
        %v344 = vpack.c.b16 %v340, %v340
        %v413 = vunpack.c.l.b16 %v271
        %v414 = vunpack.c.l.b16 %v272
        %v415 = vunpack.c.l.b16 %v273
        %v416 = vunpack.c.l.b16 %v274
        %v417 = vunpack.c.l.b16 %v275
        %v418 = vunpack.c.l.b16 %v276
        %v419 = vunpack.c.l.b16 %v277
        %v420 = vunpack.c.l.b16 %v278
        %v421 = vunpack.c.l.b16 %v279
        %v422 = vunpack.c.l.b16 %v280
        %v423 = vunpack.c.l.b16 %v281
        %v424 = vunpack.c.l.b16 %v282
        %v425 = vunpack.c.l.b16 %v283
        %v426 = vunpack.c.l.b16 %v284
        %v427 = vunpack.c.l.b16 %v285
        %v428 = vunpack.c.l.b16 %v286
        %v429 = vunpack.c.l.b16 %v287
        %v430 = vunpack.c.l.b16 %v288
        %v431 = vunpack.c.l.b16 %v289
        %v432 = vunpack.c.l.b16 %v290
        %v433 = vunpack.c.l.b16 %v291
        %v434 = vunpack.c.l.b16 %v292
        %v435 = vunpack.c.l.b16 %v293
        %v436 = vunpack.c.l.b16 %v294
        %v437 = vunpack.c.l.b16 %v295
        %v438 = vunpack.c.l.b16 %v296
        %v439 = vunpack.c.l.b16 %v297
        %v440 = vunpack.c.l.b16 %v298
        %v441 = vunpack.c.l.b16 %v299
        %v442 = vunpack.c.l.b16 %v300
        %v443 = vunpack.c.l.b16 %v301
        %v444 = vunpack.c.l.b16 %v302
        %v445 = vunpack.c.l.b16 %v303
        %v446 = vunpack.c.l.b16 %v304
        %v447 = vunpack.c.l.b16 %v305
        %v448 = vunpack.c.l.b16 %v306
        %v449 = vunpack.c.l.b16 %v307
        %v450 = vunpack.c.l.b16 %v308
        %v451 = vunpack.c.l.b16 %v309
        %v452 = vunpack.c.l.b16 %v310
        %v453 = vunpack.c.l.b16 %v311
        %v454 = vunpack.c.l.b16 %v312
        %v455 = vunpack.c.l.b16 %v313
        %v456 = vunpack.c.l.b16 %v314
        %v457 = vunpack.c.l.b16 %v315
        %v458 = vunpack.c.l.b16 %v316
        %v459 = vunpack.c.l.b16 %v317
        %v460 = vunpack.c.l.b16 %v318
        %v461 = vunpack.c.l.b16 %v319
        %v462 = vunpack.c.l.b16 %v320
        %v463 = vunpack.c.l.b16 %v321
        %v464 = vunpack.c.l.b16 %v322
        %v465 = vunpack.c.l.b16 %v323
        %v466 = vunpack.c.l.b16 %v324
        %v467 = vunpack.c.l.b16 %v325
        %v468 = vunpack.c.l.b16 %v326
        %v469 = vunpack.c.l.b16 %v327
        %v470 = vunpack.c.l.b16 %v328
        %v471 = vunpack.c.l.b16 %v329
        %v472 = vunpack.c.l.b16 %v330
        %v473 = vunpack.c.l.b16 %v331
        %v474 = vunpack.c.l.b16 %v332
        %v475 = vunpack.c.l.b16 %v333
        %v476 = vunpack.c.l.b16 %v334
        %v477 = vpack.c.b16 %v414, %v413
        %v478 = vpack.c.b16 %v416, %v415
        %v479 = vpack.c.b16 %v418, %v417
        %v480 = vpack.c.b16 %v420, %v419
        %v481 = vpack.c.b16 %v422, %v421
        %v482 = vpack.c.b16 %v424, %v423
        %v483 = vpack.c.b16 %v426, %v425
        %v484 = vpack.c.b16 %v428, %v427
        %v485 = vpack.c.b16 %v430, %v429
        %v486 = vpack.c.b16 %v432, %v431
        %v487 = vpack.c.b16 %v434, %v433
        %v488 = vpack.c.b16 %v436, %v435
        %v489 = vpack.c.b16 %v438, %v437
        %v490 = vpack.c.b16 %v440, %v439
        %v491 = vpack.c.b16 %v442, %v441
        %v492 = vpack.c.b16 %v444, %v443
        %v493 = vpack.c.b16 %v446, %v445
        %v494 = vpack.c.b16 %v448, %v447
        %v495 = vpack.c.b16 %v450, %v449
        %v496 = vpack.c.b16 %v452, %v451
        %v497 = vpack.c.b16 %v454, %v453
        %v498 = vpack.c.b16 %v456, %v455
        %v499 = vpack.c.b16 %v458, %v457
        %v500 = vpack.c.b16 %v460, %v459
        %v501 = vpack.c.b16 %v462, %v461
        %v502 = vpack.c.b16 %v464, %v463
        %v503 = vpack.c.b16 %v466, %v465
        %v504 = vpack.c.b16 %v468, %v467
        %v505 = vpack.c.b16 %v470, %v469
        %v506 = vpack.c.b16 %v472, %v471
        %v507 = vpack.c.b16 %v474, %v473
        %v508 = vpack.c.b16 %v476, %v475
        %541 = vmatprep.subr.bf16.mxu0 0
        %542 = vmatpush1.bf16.msra.mxu0 %v477
        %543 = vmatprep.subr.bf16.mxu0 0
        %544 = vmatpush1.bf16.msra.mxu0 %v478
        %545 = vmatprep.subr.bf16.mxu0 0
        %546 = vmatpush1.bf16.msra.mxu0 %v479
        %547 = vmatprep.subr.bf16.mxu0 0
        %548 = vmatpush1.bf16.msra.mxu0 %v480
        %549 = vmatprep.subr.bf16.mxu0 0
        %550 = vmatpush1.bf16.msra.mxu0 %v481
        %551 = vmatprep.subr.bf16.mxu0 0
        %552 = vmatpush1.bf16.msra.mxu0 %v482
        %553 = vmatprep.subr.bf16.mxu0 0
        %554 = vmatpush1.bf16.msra.mxu0 %v483
        %555 = vmatprep.subr.bf16.mxu0 0
        %556 = vmatpush1.bf16.msra.mxu0 %v484
        %557 = vmatprep.subr.bf16.mxu0 0
        %558 = vmatpush1.bf16.msra.mxu0 %v485
        %559 = vmatprep.subr.bf16.mxu0 0
        %560 = vmatpush1.bf16.msra.mxu0 %v486
        %561 = vmatprep.subr.bf16.mxu0 0
        %562 = vmatpush1.bf16.msra.mxu0 %v487
        %563 = vmatprep.subr.bf16.mxu0 0
        %564 = vmatpush1.bf16.msra.mxu0 %v488
        %565 = vmatprep.subr.bf16.mxu0 0
        %566 = vmatpush1.bf16.msra.mxu0 %v489
        %567 = vmatprep.subr.bf16.mxu0 0
        %568 = vmatpush1.bf16.msra.mxu0 %v490
        %569 = vmatprep.subr.bf16.mxu0 0
        %570 = vmatpush1.bf16.msra.mxu0 %v491
        %571 = vmatprep.subr.bf16.mxu0 0
        %572 = vmatpush1.bf16.msra.mxu0 %v492
        %573 = vmatprep.mubr.bf16.mxu0 %v342
        %574 = vmatmul.mubr.bf16.gmra.mrb[0].mxu0 %v341
        %v575 = vpop.f32.mrb[0].mxu0
        %v576 = vadd.f32 0.0, %v575
        %v577 = vpop.f32.mrb[0].mxu0
        %v578 = vpop.f32.mrb[0].mxu0
        %v579 = vpop.f32.mrb[0].mxu0
        %580 = vdwg.mxu0
        %581 = vmatprep.subr.bf16.mxu0 0
        %582 = vmatpush1.bf16.msra.mxu0 %v493
        %583 = vmatprep.subr.bf16.mxu0 0
        %584 = vmatpush1.bf16.msra.mxu0 %v494
        %585 = vmatprep.subr.bf16.mxu0 0
        %586 = vmatpush1.bf16.msra.mxu0 %v495
        %587 = vmatprep.subr.bf16.mxu0 0
        %588 = vmatpush1.bf16.msra.mxu0 %v496
        %589 = vmatprep.subr.bf16.mxu0 0
        %590 = vmatpush1.bf16.msra.mxu0 %v497
        %591 = vmatprep.subr.bf16.mxu0 0
        %592 = vmatpush1.bf16.msra.mxu0 %v498
        %593 = vmatprep.subr.bf16.mxu0 0
        %594 = vmatpush1.bf16.msra.mxu0 %v499
        %595 = vmatprep.subr.bf16.mxu0 0
        %596 = vmatpush1.bf16.msra.mxu0 %v500
        %597 = vmatprep.subr.bf16.mxu0 0
        %598 = vmatpush1.bf16.msra.mxu0 %v501
        %599 = vmatprep.subr.bf16.mxu0 0
        %600 = vmatpush1.bf16.msra.mxu0 %v502
        %601 = vmatprep.subr.bf16.mxu0 0
        %602 = vmatpush1.bf16.msra.mxu0 %v503
        %603 = vmatprep.subr.bf16.mxu0 0
        %604 = vmatpush1.bf16.msra.mxu0 %v504
        %605 = vmatprep.subr.bf16.mxu0 0
        %606 = vmatpush1.bf16.msra.mxu0 %v505
        %607 = vmatprep.subr.bf16.mxu0 0
        %608 = vmatpush1.bf16.msra.mxu0 %v506
        %609 = vmatprep.subr.bf16.mxu0 0
        %610 = vmatpush1.bf16.msra.mxu0 %v507
        %611 = vmatprep.subr.bf16.mxu0 0
        %612 = vmatpush1.bf16.msra.mxu0 %v508
        %613 = vmatprep.mubr.bf16.mxu0 %v344
        %614 = vmatmul.mubr.bf16.gmra.mrb[0].mxu0 %v343
        %v615 = vpop.f32.mrb[0].mxu0
        %v616 = vadd.f32 %v576, %v615
        %v617 = vpop.f32.mrb[0].mxu0
        %v618 = vpop.f32.mrb[0].mxu0
        %v619 = vpop.f32.mrb[0].mxu0
        %620 = vdwg.mxu0
        %v621 = vadd.f32 %v268, %v616
        %622 = vst [vmem:[#allocation2] sm:$0xff] %v621
        %p623 = scmp.eq.s32.totalorder %s18, 1
        // Predicated region
        $region49: #{distillation_loss.1} parent=43 // pred_check
          %p624 = pneg %p623
        $region50: #{distillation_loss.1} parent=43 // pred_check_branch
          %626 = sbr.rel (%p624) target = $region52
        $region51: #{distillation_loss.1} parent=43 // pred_region
          %v627 = vlaneseq
          %v628 = vand.u32 %v627, 127
          %vm629 = vcmp.lt.s32.totalorder %v628, 16
          %v630 = vlaneseq
          %v631 = vshrl.u32 %v630, 7
          %vm632 = vcmp.lt.s32.totalorder %v631, 2
          %v633 = vsel %vm632, 1, 0
          %v634 = vcvt.s32.f32 %v633
          %v635 = vld [vmem:[#allocation2] sm:$0xff]
          %v636 = vld [vmem:[%s2] sm:$0x1]
          %v638 = vlaneseq
          %v639 = vshrl.u32 %v638, 7
          %v640 = vsub.s32 0, %v639
          %v641 = vrot.slane %v636, %v640
          %v643 = vadd.f32 %v635, %v641
          %v644 = vsel %vm629, %v643, -1e+30
          %v645 = vld [vmem:[%s3] sm:$0xff]
          %v646 = vsel %vm629, %v645, -1e+30
          %v647 = vld [vmem:[%s4] sm:$0xff]
          %v648 = vsel %vm629, %v647, -1e+30
          %649 = vmax.xlane.f32.xlu0 %v646
          %v650 = vpop.xlane.xlu0 %649
          %v651 = vsub.f32 %v646, %v650
          %v652 = vmul.f32 %v651, 1.442695
          %v653 = vpow.pop %v652
          %654 = vadd.xlane.f32.xlu0 %v653
          %v655 = vpop.xlane.xlu0 %654
          %v656 = vlog2.pop %v655
          %v657 = vmul.f32 %v656, 0.6931472
          %v658 = vadd.f32 %v650, %v657
          %v659 = vld [vmem:[%s5] sm:$0xff]
          %660 = vset.pattern.permute.xlu0 0
          %661 = vperm.xlu0 %660, %v659
          %v662 = vpop.permute.xlu0 %661
          %vm663 = vcmp.eq.s32.totalorder %v628, %v662
          %v664 = vsel %vm663, %v646, 0.0
          %665 = vadd.xlane.f32.xlu0 %v664
          %v666 = vpop.xlane.xlu0 %665
          %v667 = vsub.f32 %v658, %v666
          %v668 = vmul.f32 %v667, %v634
          %vm669 = vcmask 7168
          %v670 = vsel %vm669, %v668, 0.0
          %671 = vadd.xlane.f32.xlu0 %v670
          %v672 = vpop.xlane.xlu0 %671
          %v673 = vrot.slane %v672, 4
          %v674 = vadd.f32 %v672, %v673
          %v675 = vrot.slane %v674, 2
          %v676 = vadd.f32 %v674, %v675
          %v677 = vrot.slane %v676, 1
          %v678 = vadd.f32 %v676, %v677
          %s679 = vtos %v678
          %v680 = vrcp.pop 2.0
          %s681 = vtos %v680
          %s682 = smul.f32 %s679, %s681
          %v683 = vrcp.pop 2.0
          %v684 = vmul.f32 %v648, %v683
          %685 = vmax.xlane.f32.xlu0 %v684
          %v686 = vpop.xlane.xlu0 %685
          %v687 = vsub.f32 %v684, %v686
          %v688 = vmul.f32 %v687, 1.442695
          %v689 = vpow.pop %v688
          %690 = vadd.xlane.f32.xlu0 %v689
          %v691 = vpop.xlane.xlu0 %690
          %v692 = vlog2.pop %v691
          %v693 = vmul.f32 %v692, 0.6931472
          %v694 = vsub.f32 %v687, %v693
          %v695 = vmul.f32 %v644, %v683
          %696 = vmax.xlane.f32.xlu0 %v695
          %v697 = vpop.xlane.xlu0 %696
          %v698 = vsub.f32 %v695, %v697
          %v699 = vmul.f32 %v698, 1.442695
          %v700 = vpow.pop %v699
          %701 = vadd.xlane.f32.xlu0 %v700
          %v702 = vpop.xlane.xlu0 %701
          %v703 = vlog2.pop %v702
          %v704 = vmul.f32 %v703, 0.6931472
          %v705 = vsub.f32 %v698, %v704
          %v706 = vrcp.pop %v702
          %v707 = vmul.f32 %v700, %v706
          %v708 = vsub.f32 %v705, %v694
          %v709 = vmul.f32 %v707, %v708
          %v710 = vmul.f32 %v709, %v634
          %711 = vadd.xlane.f32.xlu0 %v710
          %v712 = vpop.xlane.xlu0 %711
          %v713 = vrot.slane %v712, 4
          %v714 = vadd.f32 %v712, %v713
          %v715 = vrot.slane %v714, 2
          %v716 = vadd.f32 %v714, %v715
          %v717 = vrot.slane %v716, 1
          %v718 = vadd.f32 %v716, %v717
          %s719 = vtos %v718
          %s720 = smul.f32 %s719, 4.0
          %v721 = vrcp.pop 32.0
          %s722 = vtos %v721
          %s723 = smul.f32 %s720, %s722
          %s724 = smul.f32 %s682, 0.5
          %s725 = smul.f32 %s723, 0.5
          %s726 = sadd.f32 %s724, %s725
          %s727 = scalar_lea.smem [#allocation3], 0
          %728 = sst [smem:[%s727]] %s726
        $region52: #{distillation_loss.1} parent=43 // pred_fallthru
          _
        // Predicated region
        $region53: #{distillation_loss.1} parent=43 // pred_check
          %p729 = pneg %p167
        $region54: #{distillation_loss.1} parent=43 // pred_check_branch
          %731 = sbr.rel (%p729) target = $region56
        $region55: #{distillation_loss.1} parent=43 // pred_region
          %s733 = ssub.s32 16, 16
          %734 = vsyncadd [#allocation4], %s733
          %737 = dma.smem_to_hbm [#allocation3], 16, %s6, [#allocation4]
        $region56: #{distillation_loss.1} parent=43 // pred_fallthru
          _
        // Predicated region
        $region57: #{distillation_loss.1} parent=43 // pred_check
          %p738 = pneg %p167
        $region58: #{distillation_loss.1} parent=43 // pred_check_branch
          %740 = sbr.rel (%p738) target = $region60
        $region59: #{distillation_loss.1} parent=43 // pred_region
          %741 = dma.done [#allocation4], 16
        $region60: #{distillation_loss.1} parent=43 // pred_fallthru
          _
        %742 = sfence
      $region44: #{distillation_loss.1} parent=5 // pred_fallthru
        _
      %p743 = scmp.le.s32.totalorder 2, %s13
      // Predicated region
      $region61: #{distillation_loss.1} parent=5 // pred_check
        %p744 = pneg %p743
      $region62: #{distillation_loss.1} parent=5 // pred_check_branch
        %746 = sbr.rel (%p744) target = $region64
      $region63: #{distillation_loss.1} parent=5 // pred_region
        %s747 = ssub.s32 %s13, 2
      $region64: #{distillation_loss.1} parent=5 // pred_fallthru
        _
    $region6: #{distillation_loss.1} parent=1 // loop_footer
      %s17 = sadd.s32 1, %s13
    $region7: #{distillation_loss.1} parent=1 // loop_footer_branch
      %12 = sbr.rel target = $region3
    $region8: #{distillation_loss.1} parent=1 // loop_exit
      _
    %748 = vsyncpa [#allocation4], 1
    %s749 = scalar_lea.sflag [#allocation4], 1
    %750 = vsyncpa %s749, 1

</llo_original>
